<compile_context>
chip_gen: v7x
topology: tpu7x:2x2x1
jax: 0.10.0
libtpu: 0.0.40
codegen_flags: <defaults>
</compile_context>

<pallas_src>
import jax
import jax.numpy as jnp
from jax.experimental import pallas as pl
from jax.experimental.pallas import tpu as pltpu

BN_EPS = 1e-5


def mmd_resnet_kernel(x_ref, w_ref, p_ref, out_ref, xcur, hcur):
    i = pl.program_id(0)   # resnet-block index
    l = pl.program_id(1)   # layer-within-block index (0 or 1)

    @pl.when((i == 0) & (l == 0))
    def _():
        xcur[...] = x_ref[...]

    # Layer input: the block input (xcur) for layer 0, the intermediate (hcur) for layer 1.
    xin = jnp.where(l == 0, xcur[...], hcur[...])

    w = w_ref[0, 0]                      # (D, D) bf16, already transposed: y = x @ w
    pvec = p_ref[0, 0]                   # (4, D) f32: [bias, gamma, beta, prelu_a]
    b = pvec[0:1, :]
    gamma = pvec[1:2, :]
    beta = pvec[2:3, :]
    a = pvec[3:4, :]

    # Linear (bf16 MXU, f32 accumulate)
    h = jnp.dot(xin.astype(w.dtype), w, preferred_element_type=jnp.float32) + b

    # BatchNorm1d, training-mode (biased batch stats), one-pass stats folded into one FMA
    inv_b = 1.0 / h.shape[0]
    mean = jnp.sum(h, axis=0, keepdims=True) * inv_b
    ex2 = jnp.sum(h * h, axis=0, keepdims=True) * inv_b
    var = jnp.maximum(ex2 - mean * mean, 0.0)
    scale = gamma * jax.lax.rsqrt(var + BN_EPS)
    shift = beta - mean * scale
    hn = h * scale + shift

    # PReLU
    h_out = jnp.where(hn > 0, hn, a * hn)

    @pl.when(l == 0)
    def _():
        hcur[...] = h_out

    @pl.when(l == 1)
    def _():
        # ResnetBlock.forward: out = x + block(x)
        xcur[...] = xcur[...] + h_out

    @pl.when((i == pl.num_programs(0) - 1) & (l == 1))
    def _():
        # Mmd_resnet.forward: out = input + model(input)
        out_ref[...] = x_ref[...] + xcur[...]


def mmd_resnet_forward(x, Wt, P):
    """x: (B, D) f32; Wt: (n_blocks, 2, D, D) bf16 pre-transposed; P: (n_blocks, 2, 4, D) f32."""
    n_blocks = Wt.shape[0]
    B, D = x.shape

    # VMEM budget: double-buffered weight tile + double-buffered packed params
    # + resident x/out blocks + two activation scratches + slack.
    vmem_bytes = (2 * D * D * 2) + (2 * 4 * D * 4) + (4 * B * D * 4) + (2 * B * D * 4) + (4 << 20)
    vmem_bytes = int(min(max(vmem_bytes, 16 << 20), 100 << 20))

    return pl.pallas_call(
        mmd_resnet_kernel,
        out_shape=jax.ShapeDtypeStruct((B, D), jnp.float32),
        grid_spec=pltpu.PrefetchScalarGridSpec(
            num_scalar_prefetch=0,
            grid=(n_blocks, 2),
            in_specs=[
                pl.BlockSpec((B, D), lambda i, l: (0, 0)),             # input (resident)
                pl.BlockSpec((1, 1, D, D), lambda i, l: (i, l, 0, 0)),  # per-layer weight (bf16)
                pl.BlockSpec((1, 1, 4, D), lambda i, l: (i, l, 0, 0)),  # packed b/gamma/beta/a
            ],
            out_specs=pl.BlockSpec((B, D), lambda i, l: (0, 0)),
            scratch_shapes=[
                pltpu.VMEM((B, D), jnp.float32),   # xcur: activation carried across blocks
                pltpu.VMEM((B, D), jnp.float32),   # hcur: intermediate within a block
            ],
        ),
        compiler_params=pltpu.CompilerParams(
            dimension_semantics=("arbitrary", "arbitrary"),
            vmem_limit_bytes=vmem_bytes,
        ),
    )(x, Wt, P)


def init_params(key, n_blocks, dim):
    """Deterministic synthetic params matching nn.Linear / BatchNorm1d / PReLU defaults."""
    kw, kb = jax.random.split(key)
    bound = 1.0 / jnp.sqrt(jnp.float32(dim))
    W = jax.random.uniform(kw, (n_blocks, 2, dim, dim), jnp.float32, -bound, bound)  # (out, in)
    b = jax.random.uniform(kb, (n_blocks, 2, dim), jnp.float32, -bound, bound)
    gamma = jnp.ones((n_blocks, 2, dim), jnp.float32)     # BN weight init = 1
    beta = jnp.zeros((n_blocks, 2, dim), jnp.float32)     # BN bias init = 0
    a = jnp.full((n_blocks, 2, dim), 0.25, jnp.float32)   # PReLU scalar slope 0.25, broadcast
    return W, b, gamma, beta, a
    # TODO(synk): use_dropout=True path (nn.Dropout(0.5)) not implemented; module default is False.


def prepare_params(W, b, gamma, beta, a):
    """One-time host-side prep: pre-transpose weights (y = x @ Wt + b), cast to bf16, pack vectors."""
    Wt = jnp.transpose(W, (0, 1, 3, 2)).astype(jnp.bfloat16)          # (n_blocks, 2, D_in, D_out)
    P = jnp.stack([b, gamma, beta, a], axis=2).astype(jnp.float32)    # (n_blocks, 2, 4, D)
    return Wt, P


def mmd_resnet_reference(x, Wt, P):
    """Pure-JAX reference with the original module math (training-mode BN, PReLU, inner+outer
    skips), using the same bf16 weight/activation quantization as the kernel for an
    apples-to-apples comparison."""
    n_blocks = Wt.shape[0]
    cur = x
    for i in range(n_blocks):
        h = cur
        for l in range(2):
            b = P[i, l, 0][None, :]
            gamma = P[i, l, 1][None, :]
            beta = P[i, l, 2][None, :]
            a = P[i, l, 3][None, :]
            h = jnp.dot(h.astype(jnp.bfloat16), Wt[i, l],
                        preferred_element_type=jnp.float32) + b
            mean = jnp.mean(h, axis=0, keepdims=True)
            var = jnp.mean((h - mean) ** 2, axis=0, keepdims=True)
            h = (h - mean) / jnp.sqrt(var + BN_EPS) * gamma + beta
            h = jnp.where(h > 0, h, a * h)
        cur = cur + h
    return x + cur


if __name__ == "__main__":
    # Lane-dense small test shapes: D multiple of 128, B multiple of 8.
    B, D, N_BLOCKS = 8, 128, 3
    key = jax.random.PRNGKey(0)
    kx, kp = jax.random.split(key)
    x = jax.random.normal(kx, (B, D), jnp.float32)
    W, b, gamma, beta, a = init_params(kp, N_BLOCKS, D)
    Wt, P = prepare_params(W, b, gamma, beta, a)

    out = mmd_resnet_forward(x, Wt, P)
    out = jax.block_until_ready(out)

    ref = mmd_resnet_reference(x, Wt, P)
    assert out.shape == (B, D)
    assert jnp.allclose(out, ref, atol=2e-3, rtol=2e-3), "mismatch vs pure-JAX reference"
    print("KERNEL_OK")
</pallas_src>

<mosaic_0001>
module attributes {stable_mosaic.version = 11 : i64} {
  func.func @mmd_resnet_kernel(%arg0: i32, %arg1: i32, %arg2: memref<8x128xf32, #tpu.memory_space<vmem>>, %arg3: memref<1x1x128x128xbf16, #tpu.memory_space<vmem>>, %arg4: memref<1x1x4x128xf32, #tpu.memory_space<vmem>>, %arg5: memref<8x128xf32, #tpu.memory_space<vmem>>, %arg6: memref<8x128xf32, #tpu.memory_space<vmem>>, %arg7: memref<8x128xf32, #tpu.memory_space<vmem>>) attributes {dimension_semantics = [#tpu.dimension_semantics<arbitrary>, #tpu.dimension_semantics<arbitrary>], iteration_bounds = array<i64: 3, 2>, scalar_prefetch = 0 : i64, scratch_operands = 2 : i64, tpu.core_type = #tpu.core_type<tc>, window_params = [{pipeline_mode = #tpu.pipeline_mode<synchronous>, transform_indices = @transform_0, window_bounds = array<i64: 8, 128>}, {transform_indices = @transform_1, window_bounds = array<i64: 1, 1, 128, 128>}, {transform_indices = @transform_2, window_bounds = array<i64: 1, 1, 4, 128>}, {pipeline_mode = #tpu.pipeline_mode<synchronous>, transform_indices = @transform_3, window_bounds = array<i64: 8, 128>}]} {
    %c0_i32 = arith.constant 0 : i32
    %0 = arith.cmpi eq, %arg0, %c0_i32 : i32
    %c0_i32_0 = arith.constant 0 : i32
    %1 = arith.cmpi eq, %arg1, %c0_i32_0 : i32
    %2 = arith.andi %0, %1 : i1
    %3 = arith.extui %2 : i1 to i32
    %c0_i32_1 = arith.constant 0 : i32
    %4 = arith.cmpi ne, %3, %c0_i32_1 : i32
    scf.if %4 {
      %c0_26 = arith.constant 0 : index
      %c0_27 = arith.constant 0 : index
      %60 = vector.load %arg2[%c0_26, %c0_27] : memref<8x128xf32, #tpu.memory_space<vmem>>, vector<8x128xf32>
      %c0_28 = arith.constant 0 : index
      %c0_29 = arith.constant 0 : index
      %61 = vector.load %arg6[%c0_28, %c0_29] : memref<8x128xf32, #tpu.memory_space<vmem>>, vector<8x128xf32>
      tpu.vector_store %arg6[%c0_28, %c0_29], %60 {strides = array<i32>} : memref<8x128xf32, #tpu.memory_space<vmem>>, vector<8x128xf32>,
    } else {
    }
    %c0_i32_2 = arith.constant 0 : i32
    %5 = arith.cmpi eq, %arg1, %c0_i32_2 : i32
    %c0 = arith.constant 0 : index
    %c0_3 = arith.constant 0 : index
    %6 = vector.load %arg6[%c0, %c0_3] : memref<8x128xf32, #tpu.memory_space<vmem>>, vector<8x128xf32>
    %c0_4 = arith.constant 0 : index
    %c0_5 = arith.constant 0 : index
    %7 = vector.load %arg7[%c0_4, %c0_5] : memref<8x128xf32, #tpu.memory_space<vmem>>, vector<8x128xf32>
    %8 = arith.select %5, %6, %7 : vector<8x128xf32>
    %c0_6 = arith.constant 0 : index
    %c0_7 = arith.constant 0 : index
    %c0_8 = arith.constant 0 : index
    %c0_9 = arith.constant 0 : index
    %9 = vector.load %arg3[%c0_6, %c0_7, %c0_8, %c0_9] : memref<1x1x128x128xbf16, #tpu.memory_space<vmem>>, vector<1x1x128x128xbf16>
    %10 = vector.shape_cast %9 : vector<1x1x128x128xbf16> to vector<128x128xbf16>
    %c0_10 = arith.constant 0 : index
    %c0_11 = arith.constant 0 : index
    %c0_12 = arith.constant 0 : index
    %c0_13 = arith.constant 0 : index
    %11 = vector.load %arg4[%c0_10, %c0_11, %c0_12, %c0_13] : memref<1x1x4x128xf32, #tpu.memory_space<vmem>>, vector<1x1x4x128xf32>
    %12 = vector.shape_cast %11 : vector<1x1x4x128xf32> to vector<4x128xf32>
    %13 = vector.extract_strided_slice %12 {offsets = [0, 0], sizes = [1, 128], strides = [1, 1]} : vector<4x128xf32> to vector<1x128xf32>
    %14 = vector.extract_strided_slice %12 {offsets = [1, 0], sizes = [1, 128], strides = [1, 1]} : vector<4x128xf32> to vector<1x128xf32>
    %15 = vector.extract_strided_slice %12 {offsets = [2, 0], sizes = [1, 128], strides = [1, 1]} : vector<4x128xf32> to vector<1x128xf32>
    %16 = vector.extract_strided_slice %12 {offsets = [3, 0], sizes = [1, 128], strides = [1, 1]} : vector<4x128xf32> to vector<1x128xf32>
    %17 = arith.truncf %8 : vector<8x128xf32> to vector<8x128xbf16>
    %cst = arith.constant dense<0.000000e+00> : vector<8x128xf32>
    %18 = tpu.matmul %17, %10, %cst {dimension_numbers = #tpu.dot_dimension_numbers<[1], [0], [0], [1], [0, 0, 1, 1], [], []>} : vector<8x128xbf16>, vector<128x128xbf16>, vector<8x128xf32> -> vector<8x128xf32>
    %19 = vector.broadcast %13 : vector<1x128xf32> to vector<8x128xf32>
    %20 = arith.addf %18, %19 : vector<8x128xf32>
    %cst_14 = arith.constant dense<0.000000e+00> : vector<128xf32>
    %21 = vector.multi_reduction <add>, %20, %cst_14 [0] : vector<8x128xf32> to vector<128xf32>
    %22 = vector.shape_cast %21 : vector<128xf32> to vector<1x128xf32>
    %cst_15 = arith.constant 1.250000e-01 : f32
    %23 = vector.broadcast %cst_15 : f32 to vector<1x128xf32>
    %24 = arith.mulf %22, %23 : vector<1x128xf32>
    %25 = arith.mulf %20, %20 : vector<8x128xf32>
    %cst_16 = arith.constant dense<0.000000e+00> : vector<128xf32>
    %26 = vector.multi_reduction <add>, %25, %cst_16 [0] : vector<8x128xf32> to vector<128xf32>
    %27 = vector.shape_cast %26 : vector<128xf32> to vector<1x128xf32>
    %cst_17 = arith.constant 1.250000e-01 : f32
    %28 = vector.broadcast %cst_17 : f32 to vector<1x128xf32>
    %29 = arith.mulf %27, %28 : vector<1x128xf32>
    %30 = arith.mulf %24, %24 : vector<1x128xf32>
    %31 = arith.subf %29, %30 : vector<1x128xf32>
    %cst_18 = arith.constant 0.000000e+00 : f32
    %32 = vector.broadcast %cst_18 : f32 to vector<1x128xf32>
    %33 = arith.maximumf %31, %32 : vector<1x128xf32>
    %cst_19 = arith.constant 9.99999974E-6 : f32
    %34 = vector.broadcast %cst_19 : f32 to vector<1x128xf32>
    %35 = arith.addf %33, %34 : vector<1x128xf32>
    %36 = math.rsqrt %35 : vector<1x128xf32>
    %37 = arith.mulf %14, %36 : vector<1x128xf32>
    %38 = arith.mulf %24, %37 : vector<1x128xf32>
    %39 = arith.subf %15, %38 : vector<1x128xf32>
    %40 = vector.broadcast %37 : vector<1x128xf32> to vector<8x128xf32>
    %41 = arith.mulf %20, %40 : vector<8x128xf32>
    %42 = vector.broadcast %39 : vector<1x128xf32> to vector<8x128xf32>
    %43 = arith.addf %41, %42 : vector<8x128xf32>
    %cst_20 = arith.constant 0.000000e+00 : f32
    %44 = vector.broadcast %cst_20 : f32 to vector<8x128xf32>
    %45 = arith.cmpf ogt, %43, %44 : vector<8x128xf32>
    %46 = vector.broadcast %16 : vector<1x128xf32> to vector<8x128xf32>
    %47 = arith.mulf %46, %43 : vector<8x128xf32>
    %48 = arith.select %45, %43, %47 : vector<8x128xi1>, vector<8x128xf32>
    %c0_i32_21 = arith.constant 0 : i32
    %49 = arith.cmpi eq, %arg1, %c0_i32_21 : i32
    %50 = arith.extui %49 : i1 to i32
    %c0_i32_22 = arith.constant 0 : i32
    %51 = arith.cmpi ne, %50, %c0_i32_22 : i32
    scf.if %51 {
      %c0_26 = arith.constant 0 : index
      %c0_27 = arith.constant 0 : index
      %60 = vector.load %arg7[%c0_26, %c0_27] : memref<8x128xf32, #tpu.memory_space<vmem>>, vector<8x128xf32>
      tpu.vector_store %arg7[%c0_26, %c0_27], %48 {strides = array<i32>} : memref<8x128xf32, #tpu.memory_space<vmem>>, vector<8x128xf32>,
    } else {
    }
    %c1_i32 = arith.constant 1 : i32
    %52 = arith.cmpi eq, %arg1, %c1_i32 : i32
    %53 = arith.extui %52 : i1 to i32
    %c0_i32_23 = arith.constant 0 : i32
    %54 = arith.cmpi ne, %53, %c0_i32_23 : i32
    scf.if %54 {
      %c0_26 = arith.constant 0 : index
      %c0_27 = arith.constant 0 : index
      %60 = vector.load %arg6[%c0_26, %c0_27] : memref<8x128xf32, #tpu.memory_space<vmem>>, vector<8x128xf32>
      %61 = arith.addf %60, %48 : vector<8x128xf32>
      %c0_28 = arith.constant 0 : index
      %c0_29 = arith.constant 0 : index
      %62 = vector.load %arg6[%c0_28, %c0_29] : memref<8x128xf32, #tpu.memory_space<vmem>>, vector<8x128xf32>
      tpu.vector_store %arg6[%c0_28, %c0_29], %61 {strides = array<i32>} : memref<8x128xf32, #tpu.memory_space<vmem>>, vector<8x128xf32>,
    } else {
    }
    %c2_i32 = arith.constant 2 : i32
    %55 = arith.cmpi eq, %arg0, %c2_i32 : i32
    %c1_i32_24 = arith.constant 1 : i32
    %56 = arith.cmpi eq, %arg1, %c1_i32_24 : i32
    %57 = arith.andi %55, %56 : i1
    %58 = arith.extui %57 : i1 to i32
    %c0_i32_25 = arith.constant 0 : i32
    %59 = arith.cmpi ne, %58, %c0_i32_25 : i32
    scf.if %59 {
      %c0_26 = arith.constant 0 : index
      %c0_27 = arith.constant 0 : index
      %60 = vector.load %arg2[%c0_26, %c0_27] : memref<8x128xf32, #tpu.memory_space<vmem>>, vector<8x128xf32>
      %c0_28 = arith.constant 0 : index
      %c0_29 = arith.constant 0 : index
      %61 = vector.load %arg6[%c0_28, %c0_29] : memref<8x128xf32, #tpu.memory_space<vmem>>, vector<8x128xf32>
      %62 = arith.addf %60, %61 : vector<8x128xf32>
      %c0_30 = arith.constant 0 : index
      %c0_31 = arith.constant 0 : index
      %63 = vector.load %arg5[%c0_30, %c0_31] : memref<8x128xf32, #tpu.memory_space<vmem>>, vector<8x128xf32>
      tpu.vector_store %arg5[%c0_30, %c0_31], %62 {strides = array<i32>} : memref<8x128xf32, #tpu.memory_space<vmem>>, vector<8x128xf32>,
    } else {
    }
    return
  }
  func.func @transform_0(%arg0: i32, %arg1: i32) -> (i32, i32) {
    %c0_i32 = arith.constant 0 : i32
    %c0_i32_0 = arith.constant 0 : i32
    %c0_i32_1 = arith.constant 0 : i32
    return %c0_i32, %c0_i32_0 : i32, i32
  }
  func.func @transform_1(%arg0: i32, %arg1: i32) -> (i32, i32, i32, i32) {
    %c0_i32 = arith.constant 0 : i32
    %c0_i32_0 = arith.constant 0 : i32
    %c0_i32_1 = arith.constant 0 : i32
    return %arg0, %arg1, %c0_i32, %c0_i32_0 : i32, i32, i32, i32
  }
  func.func @transform_2(%arg0: i32, %arg1: i32) -> (i32, i32, i32, i32) {
    %c0_i32 = arith.constant 0 : i32
    %c0_i32_0 = arith.constant 0 : i32
    %c0_i32_1 = arith.constant 0 : i32
    return %arg0, %arg1, %c0_i32, %c0_i32_0 : i32, i32, i32, i32
  }
  func.func @transform_3(%arg0: i32, %arg1: i32) -> (i32, i32) {
    %c0_i32 = arith.constant 0 : i32
    %c0_i32_0 = arith.constant 0 : i32
    %c0_i32_1 = arith.constant 0 : i32
    return %c0_i32, %c0_i32_0 : i32, i32
  }
}

</mosaic_0001>

<llo_original>
// kernel: tpu_custom_call.1
$region0: #{tpu_custom_call.1}
  #allocation0 [shape = 'u32[]', space=smem, size = 0x4, offset = 0x4, fixed_abs, tag = 'smem constant byte address 0x4 - core index']
  #allocation1 [shape = 'u32[144,128]{1,0:T(1,128)}', space=vmem, size = 0x12000, scoped, tag = 'internal scratch']
  #allocation2 [shape = 'f32[8,128]{1,0:T(8,128)}', space=vmem, size = 0x1000, scoped, tag = 'scratch operand']
  #allocation3 [shape = 'f32[8,128]{1,0:T(8,128)}', space=vmem, size = 0x1000, scoped, tag = 'scratch operand']
  %s0 = inlined_call_operand.hbm [shape: f32[8,128], index: 0, kind: input, shape index: {}]
  %s1 = inlined_call_operand.hbm [shape: bf16[3,2,128,128], index: 1, kind: input, shape index: {}]
  %s2 = inlined_call_operand.hbm [shape: f32[3,2,4,128], index: 2, kind: input, shape index: {}]
  %s3 = inlined_call_operand.hbm [shape: f32[8,128], index: 3, kind: output, shape index: {}]
  %s4 = sld [smem:[#allocation0]]
  $region73: #{tpu_custom_call.1} parent=0
    _
  %s6 = ssub.s32 1, %s4
  %s7 = scalar_select 0, %s6, %s4
  $region1: #{tpu_custom_call.1} parent=0
    #allocation4 [shape = 'u8[4096]{0}', space=vmem, size = 0x1000, scoped, tag = 'input window, operand 0, single buffered']
    #allocation5 [shape = 's32[2]{0}', space=sflag, size = 0x8, scoped, tag = 'scoped memory for tpu_custom_call.1']
    #allocation6 [shape = 's32[2]{0}', space=sflag, size = 0x8, scoped, tag = 'scoped memory for tpu_custom_call.1']
    #allocation7 [shape = 'u8[65536]{0}', space=vmem, size = 0x10000, scoped, tag = 'input window, operand 1']
    #allocation8 [shape = 's32[2]{0}', space=sflag, size = 0x8, scoped, tag = 'scoped memory for tpu_custom_call.1']
    #allocation9 [shape = 'u8[4096]{0}', space=vmem, size = 0x1000, scoped, tag = 'input window, operand 2']
    #allocation10 [shape = 'u8[4096]{0}', space=vmem, size = 0x1000, scoped, tag = 'output window, operand 0, single buffered']
    %8 = vsyncpa [#allocation5], 0
    %9 = vsyncpa [#allocation8], 0
    %s10 = scalar_lea.sflag [#allocation8], 1
    %11 = vsyncpa %s10, 0
    %12 = vsyncpa [#allocation6], 0
    loop: start=0, step=1, limit=8
    $region2: #{tpu_custom_call.1} parent=1 // loop_pre_header
      _
    $region3: #{tpu_custom_call.1} parent=1 // loop_header
      %s14 = sphi 0, %s18
      %p15 = scmp.ge.s32.totalorder %s14, 8
      %s21 = sphi 0, %s33
      %s22 = sphi 0, %s29
      %s23 = sphi 0, %s21
      %s24 = sphi 0, %s22
      %s25 = sphi 0, %s23
      %s26 = sphi 0, %s24
      %s34 = sphi 0, %s34
      %s36 = sphi 0, %s34
      %s37 = sphi 0, %s36
      %s51 = sphi 0, %s37
      %s59 = sphi 0, %s61
      %s62 = sphi 0, %s59
      %s63 = sphi 0, %s62
      %s79 = sphi 0, %s63
      %s87 = sphi 0, %s89
      %s90 = sphi 0, %s87
      %s91 = sphi 0, %s90
      %s107 = sphi 0, %s91
      %s111 = sphi 0, %s111
      %s113 = sphi 0, %s111
      %s114 = sphi 0, %s113
      %s128 = sphi 0, %s114
    $region4: #{tpu_custom_call.1} parent=1 // loop_header_branch
      %17 = sbr.rel (%p15) target = $region8
    $region5: #{tpu_custom_call.1} parent=1 // loop_body
      %s19 = ssub.s32 %s14, 1
      %s20 = ssub.s32 %s14, 2
      %s27 = sadd.s32 1, %s22
      %p28 = scmp.ge.s32.totalorder %s27, 2
      %s29 = scalar_select %p28, 0, %s27
      %s30 = sadd.s32 1, %s21
      %s31 = scalar_select %p28, %s30, %s21
      %p32 = scmp.ge.s32.totalorder %s31, 3
      %s33 = scalar_select %p32, 0, %s31
      %s35 = sadd.s32 %s34, 1
      %p38 = scmp.eq.s32.totalorder %s14, 5
      %p39 = scmp.ne.s32.totalorder %s34, %s36
      %p40 = scmp.eq.s32.totalorder %s14, 0
      %p41 = por %p39, %p40
      %p42 = scmp.ne.s32.totalorder %s34, %s36
      %p43 = scmp.eq.s32.totalorder %s19, 5
      %p44 = por %p42, %p43
      %p45 = scmp.ne.s32.totalorder %s36, %s37
      %p46 = scmp.eq.s32.totalorder %s19, 0
      %p47 = por %p45, %p46
      %p48 = scmp.ne.s32.totalorder %s36, %s37
      %p49 = scmp.eq.s32.totalorder %s20, 5
      %p50 = por %p48, %p49
      %p52 = scmp.ne.s32.totalorder %s37, %s51
      %p53 = scmp.eq.s32.totalorder %s20, 0
      %p54 = por %p52, %p53
      %s55 = ssub.s32 %s21, %s33
      %s56 = ssub.s32 %s22, %s29
      %s57 = sor.u32 %s55, %s56
      %p58 = scmp.eq.s32.totalorder %s57, 0
      %s60 = sadd.s32 %s59, 1
      %s61 = scalar_select %p58, %s59, %s60
      %p64 = pneg %p58
      %p65 = scmp.eq.s32.totalorder %s14, 5
      %p66 = por %p64, %p65
      %p67 = scmp.ne.s32.totalorder %s59, %s62
      %p68 = scmp.eq.s32.totalorder %s14, 0
      %p69 = por %p67, %p68
      %p70 = scmp.ne.s32.totalorder %s59, %s62
      %p71 = scmp.eq.s32.totalorder %s19, 5
      %p72 = por %p70, %p71
      %p73 = scmp.ne.s32.totalorder %s62, %s63
      %p74 = scmp.eq.s32.totalorder %s19, 0
      %p75 = por %p73, %p74
      %p76 = scmp.ne.s32.totalorder %s62, %s63
      %p77 = scmp.eq.s32.totalorder %s20, 5
      %p78 = por %p76, %p77
      %p80 = scmp.ne.s32.totalorder %s63, %s79
      %p81 = scmp.eq.s32.totalorder %s20, 0
      %p82 = por %p80, %p81
      %s83 = ssub.s32 %s21, %s33
      %s84 = ssub.s32 %s22, %s29
      %s85 = sor.u32 %s83, %s84
      %p86 = scmp.eq.s32.totalorder %s85, 0
      %s88 = sadd.s32 %s87, 1
      %s89 = scalar_select %p86, %s87, %s88
      %p92 = pneg %p86
      %p93 = scmp.eq.s32.totalorder %s14, 5
      %p94 = por %p92, %p93
      %p95 = scmp.ne.s32.totalorder %s87, %s90
      %p96 = scmp.eq.s32.totalorder %s14, 0
      %p97 = por %p95, %p96
      %p98 = scmp.ne.s32.totalorder %s87, %s90
      %p99 = scmp.eq.s32.totalorder %s19, 5
      %p100 = por %p98, %p99
      %p101 = scmp.ne.s32.totalorder %s90, %s91
      %p102 = scmp.eq.s32.totalorder %s19, 0
      %p103 = por %p101, %p102
      %p104 = scmp.ne.s32.totalorder %s90, %s91
      %p105 = scmp.eq.s32.totalorder %s20, 5
      %p106 = por %p104, %p105
      %p108 = scmp.ne.s32.totalorder %s91, %s107
      %p109 = scmp.eq.s32.totalorder %s20, 0
      %p110 = por %p108, %p109
      %s112 = sadd.s32 %s111, 1
      %p115 = scmp.eq.s32.totalorder %s14, 5
      %p116 = scmp.ne.s32.totalorder %s111, %s113
      %p117 = scmp.eq.s32.totalorder %s14, 0
      %p118 = por %p116, %p117
      %p119 = scmp.ne.s32.totalorder %s111, %s113
      %p120 = scmp.eq.s32.totalorder %s19, 5
      %p121 = por %p119, %p120
      %p122 = scmp.ne.s32.totalorder %s113, %s114
      %p123 = scmp.eq.s32.totalorder %s19, 0
      %p124 = por %p122, %p123
      %p125 = scmp.ne.s32.totalorder %s113, %s114
      %p126 = scmp.eq.s32.totalorder %s20, 5
      %p127 = por %p125, %p126
      %p129 = scmp.ne.s32.totalorder %s114, %s128
      %p130 = scmp.eq.s32.totalorder %s20, 0
      %p131 = por %p129, %p130
      %p132 = scmp.le.s32.totalorder 1, %s14
      %p133 = scmp.lt.s32.totalorder %s14, 7
      %p134 = pnand %p132, %p133
      %p135 = pneg %p134
      // Predicated region
      $region9: #{tpu_custom_call.1} parent=5 // pred_check
        _
      $region10: #{tpu_custom_call.1} parent=5 // pred_check_branch
        %137 = sbr.rel (%p134) target = $region12
      $region11: #{tpu_custom_call.1} parent=5 // pred_region
        %s138 = ssub.s32 %s14, 1
        // Predicated region
        $region13: #{tpu_custom_call.1} parent=11 // pred_check
          %p139 = pneg %p47
        $region14: #{tpu_custom_call.1} parent=11 // pred_check_branch
          %141 = sbr.rel (%p139) target = $region16
        $region15: #{tpu_custom_call.1} parent=11 // pred_region
          %s143 = ssub.s32 128, 128
          %144 = vsyncadd [#allocation5], %s143
          %s146 = sshll.u32 [#allocation4], 4
          %s147 = int_to_ptr.vmem [resolvable:$true] %s146
          %149 = dma.hbm_to_vmem [thread:$0]  %s0, 128, %s147, [#allocation5]
        $region16: #{tpu_custom_call.1} parent=11 // pred_fallthru
          _
      $region12: #{tpu_custom_call.1} parent=5 // pred_fallthru
        _
      %p150 = scmp.lt.s32.totalorder %s14, 6
      // Predicated region
      $region17: #{tpu_custom_call.1} parent=5 // pred_check
        %p151 = pneg %p150
      $region18: #{tpu_custom_call.1} parent=5 // pred_check_branch
        %153 = sbr.rel (%p151) target = $region20
      $region19: #{tpu_custom_call.1} parent=5 // pred_region
        // Predicated region
        $region21: #{tpu_custom_call.1} parent=19 // pred_check
          %p154 = pneg %p69
        $region22: #{tpu_custom_call.1} parent=19 // pred_check_branch
          %156 = sbr.rel (%p154) target = $region24
        $region23: #{tpu_custom_call.1} parent=19 // pred_region
          %s157 = sand.u32 %s14, 1
          %s158 = scalar_lea.sflag [#allocation8], %s157
          %s159 = sand.u32 %s59, 1
          %s160 = smul.addr %s159, 64
          %s161 = scalar_lea.vmem [#allocation7], %s160
          %s163 = ssub.s32 1024, 1024
          %164 = vsyncadd %s158, %s163
          %s165 = smul.addr %s22, 16
          %s166 = smul.addr %s21, 32
          %s167 = sadd.s32 %s165, %s166
          %s168 = smul.addr %s167, 64
          %s169 = scalar_lea.hbm %s1, %s168
          %s170 = sshll.u32 %s161, 4
          %s171 = int_to_ptr.vmem [resolvable:$true] %s170
          %176 = dma.hbm_to_vmem [thread:$0]  %s169, 1024, %s171, %s158, 64, 64, 4
        $region24: #{tpu_custom_call.1} parent=19 // pred_fallthru
          _
        // Predicated region
        $region25: #{tpu_custom_call.1} parent=19 // pred_check
          %p177 = pneg %p97
        $region26: #{tpu_custom_call.1} parent=19 // pred_check_branch
          %179 = sbr.rel (%p177) target = $region28
        $region27: #{tpu_custom_call.1} parent=19 // pred_region
          %s180 = sand.u32 %s14, 1
          %s181 = scalar_lea.sflag [#allocation8], %s180
          %s182 = sand.u32 %s87, 1
          %s183 = smul.addr %s182, 4
          %s184 = scalar_lea.vmem [#allocation9], %s183
          %s186 = ssub.s32 64, 64
          %187 = vsyncadd %s181, %s186
          %s188 = smul.addr %s21, 2
          %s189 = sadd.s32 %s22, %s188
          %s190 = smul.addr %s189, 64
          %s191 = scalar_lea.hbm %s2, %s190
          %s193 = sshll.u32 %s184, 4
          %s194 = int_to_ptr.vmem [resolvable:$true] %s193
          %196 = dma.hbm_to_vmem [thread:$0]  %s191, 64, %s194, %s181
        $region28: #{tpu_custom_call.1} parent=19 // pred_fallthru
          _
      $region20: #{tpu_custom_call.1} parent=5 // pred_fallthru
        _
      %p197 = scmp.le.s32.totalorder 1, %s14
      %p198 = scmp.lt.s32.totalorder %s14, 7
      %p199 = pnand %p197, %p198
      %p200 = pneg %p199
      // Predicated region
      $region29: #{tpu_custom_call.1} parent=5 // pred_check
        _
      $region30: #{tpu_custom_call.1} parent=5 // pred_check_branch
        %202 = sbr.rel (%p199) target = $region32
      $region31: #{tpu_custom_call.1} parent=5 // pred_region
        %s203 = ssub.s32 %s14, 1
        // Predicated region
        $region33: #{tpu_custom_call.1} parent=31 // pred_check
          %p204 = pneg %p47
        $region34: #{tpu_custom_call.1} parent=31 // pred_check_branch
          %206 = sbr.rel (%p204) target = $region36
        $region35: #{tpu_custom_call.1} parent=31 // pred_region
          %207 = dma.done [#allocation5], 128
        $region36: #{tpu_custom_call.1} parent=31 // pred_fallthru
          _
        %s208 = sand.u32 %s19, 1
        %s209 = scalar_lea.sflag [#allocation8], %s208
        %s210 = sand.u32 %s62, 1
        %s211 = smul.addr %s210, 64
        %s212 = scalar_lea.vmem [#allocation7], %s211
        // Predicated region
        $region37: #{tpu_custom_call.1} parent=31 // pred_check
          %p213 = pneg %p75
        $region38: #{tpu_custom_call.1} parent=31 // pred_check_branch
          %215 = sbr.rel (%p213) target = $region40
        $region39: #{tpu_custom_call.1} parent=31 // pred_region
          %216 = dma.done %s209, 1024
        $region40: #{tpu_custom_call.1} parent=31 // pred_fallthru
          _
        %s217 = sand.u32 %s19, 1
        %s218 = scalar_lea.sflag [#allocation8], %s217
        %s219 = sand.u32 %s90, 1
        %s220 = smul.addr %s219, 4
        %s221 = scalar_lea.vmem [#allocation9], %s220
        // Predicated region
        $region41: #{tpu_custom_call.1} parent=31 // pred_check
          %p222 = pneg %p103
        $region42: #{tpu_custom_call.1} parent=31 // pred_check_branch
          %224 = sbr.rel (%p222) target = $region44
        $region43: #{tpu_custom_call.1} parent=31 // pred_region
          %225 = dma.done %s218, 64
        $region44: #{tpu_custom_call.1} parent=31 // pred_fallthru
          _
        %p226 = pneg %p47
        %p227 = pneg %p44
        %s228 = sand.u32 %s19, 1
        %s229 = scalar_lea.sflag [#allocation8], %s228
        %s230 = sand.u32 %s62, 1
        %s231 = smul.addr %s230, 64
        %s232 = scalar_lea.vmem [#allocation7], %s231
        %p233 = pneg %p75
        %p234 = pneg %p72
        %s235 = sand.u32 %s19, 1
        %s236 = scalar_lea.sflag [#allocation8], %s235
        %s237 = sand.u32 %s90, 1
        %s238 = smul.addr %s237, 4
        %s239 = scalar_lea.vmem [#allocation9], %s238
        %p240 = pneg %p103
        %p241 = pneg %p100
        %p242 = pneg %p124
        %p243 = pneg %p121
        %p245 = scmp.eq.s32.totalorder %s23, 0
        %p246 = scmp.eq.s32.totalorder %s24, 0
        %p247 = pnand %p245, %p246
        %p248 = pneg %p247
        // Predicated region
        $region45: #{tpu_custom_call.1} parent=31 // pred_check
          _
        $region46: #{tpu_custom_call.1} parent=31 // pred_check_branch
          %250 = sbr.rel (%p247) target = $region48
        $region47: #{tpu_custom_call.1} parent=31 // pred_region
          %v251 = vld [vmem:[#allocation4] sm:$0xff]
          %252 = vst [vmem:[#allocation2] sm:$0xff] %v251
        $region48: #{tpu_custom_call.1} parent=31 // pred_fallthru
          _
        %v253 = vld [vmem:[#allocation2] sm:$0xff]
        %v254 = vld [vmem:[#allocation3] sm:$0xff]
        %s255 = scalar_select %p246, 1, 0
        %v256 = vstv %s255
        %vm257 = vcmp.eq.s32.totalorder %v256, 1
        %v258 = vsel %vm257, %v253, %v254
        %v259 = vld [vmem:[%s212] sm:$0xf]
        %v260 = vld [vmem:[%s212 + $0x4] sm:$0xf]
        %v261 = vld [vmem:[%s212 + $0x8] sm:$0xf]
        %v262 = vld [vmem:[%s212 + $0xc] sm:$0xf]
        %v263 = vld [vmem:[%s212 + $0x10] sm:$0xf]
        %v264 = vld [vmem:[%s212 + $0x14] sm:$0xf]
        %v265 = vld [vmem:[%s212 + $0x18] sm:$0xf]
        %v266 = vld [vmem:[%s212 + $0x1c] sm:$0xf]
        %v267 = vld [vmem:[%s212 + $0x20] sm:$0xf]
        %v268 = vld [vmem:[%s212 + $0x24] sm:$0xf]
        %v269 = vld [vmem:[%s212 + $0x28] sm:$0xf]
        %v270 = vld [vmem:[%s212 + $0x2c] sm:$0xf]
        %v271 = vld [vmem:[%s212 + $0x30] sm:$0xf]
        %v272 = vld [vmem:[%s212 + $0x34] sm:$0xf]
        %v273 = vld [vmem:[%s212 + $0x38] sm:$0xf]
        %v274 = vld [vmem:[%s212 + $0x3c] sm:$0xf]
        %v275 = vld [vmem:[%s221] sm:$0xf]
        %v276 = vpack.c.bf16 %v258, %v258
        %v277 = vlaneseq
        %v278 = vshrl.u32 %v277, 7
        %v279 = vsub.s32 0, %v278
        %v280 = vrot.slane %v275, %v279
        %v297 = vunpack.c.l.b16 %v259
        %v298 = vunpack.c.l.b16 %v260
        %v299 = vunpack.c.l.b16 %v261
        %v300 = vunpack.c.l.b16 %v262
        %v301 = vunpack.c.l.b16 %v263
        %v302 = vunpack.c.l.b16 %v264
        %v303 = vunpack.c.l.b16 %v265
        %v304 = vunpack.c.l.b16 %v266
        %v305 = vunpack.c.l.b16 %v267
        %v306 = vunpack.c.l.b16 %v268
        %v307 = vunpack.c.l.b16 %v269
        %v308 = vunpack.c.l.b16 %v270
        %v309 = vunpack.c.l.b16 %v271
        %v310 = vunpack.c.l.b16 %v272
        %v311 = vunpack.c.l.b16 %v273
        %v312 = vunpack.c.l.b16 %v274
        %v313 = vpack.c.b16 %v298, %v297
        %v314 = vpack.c.b16 %v300, %v299
        %v315 = vpack.c.b16 %v302, %v301
        %v316 = vpack.c.b16 %v304, %v303
        %v317 = vpack.c.b16 %v306, %v305
        %v318 = vpack.c.b16 %v308, %v307
        %v319 = vpack.c.b16 %v310, %v309
        %v320 = vpack.c.b16 %v312, %v311
        %329 = vmatprep.subr.bf16.mxu0 0
        %330 = vmatpush1.bf16.msra.mxu0 %v313
        %331 = vmatprep.subr.bf16.mxu0 0
        %332 = vmatpush1.bf16.msra.mxu0 %v314
        %333 = vmatprep.subr.bf16.mxu0 0
        %334 = vmatpush1.bf16.msra.mxu0 %v315
        %335 = vmatprep.subr.bf16.mxu0 0
        %336 = vmatpush1.bf16.msra.mxu0 %v316
        %337 = vmatprep.subr.bf16.mxu0 0
        %338 = vmatpush1.bf16.msra.mxu0 %v317
        %339 = vmatprep.subr.bf16.mxu0 0
        %340 = vmatpush1.bf16.msra.mxu0 %v318
        %341 = vmatprep.subr.bf16.mxu0 0
        %342 = vmatpush1.bf16.msra.mxu0 %v319
        %343 = vmatprep.subr.bf16.mxu0 0
        %344 = vmatpush1.bf16.msra.mxu0 %v320
        %345 = vmatprep.subr.bf16.mxu0 0
        %346 = vmatpush1.bf16.msra.mxu0 0
        %347 = vmatprep.subr.bf16.mxu0 0
        %348 = vmatpush1.bf16.msra.mxu0 0
        %349 = vmatprep.subr.bf16.mxu0 0
        %350 = vmatpush1.bf16.msra.mxu0 0
        %351 = vmatprep.subr.bf16.mxu0 0
        %352 = vmatpush1.bf16.msra.mxu0 0
        %353 = vmatprep.subr.bf16.mxu0 0
        %354 = vmatpush1.bf16.msra.mxu0 0
        %355 = vmatprep.subr.bf16.mxu0 0
        %356 = vmatpush1.bf16.msra.mxu0 0
        %357 = vmatprep.subr.bf16.mxu0 0
        %358 = vmatpush1.bf16.msra.mxu0 0
        %359 = vmatprep.subr.bf16.mxu0 0
        %360 = vmatpush1.bf16.msra.mxu0 0
        %361 = vmatprep.mubr.bf16.mxu0 0
        %362 = vmatmul.mubr.bf16.gmra.mrb[0].mxu0 %v276
        %v363 = vpop.f32.mrb[0].mxu0
        %v364 = vadd.f32 %v280, %v363
        %v365 = vpop.f32.mrb[0].mxu0
        %v366 = vpop.f32.mrb[0].mxu0
        %v367 = vpop.f32.mrb[0].mxu0
        %368 = vdwg.mxu0
        %v369 = vrot.slane %v364, 4
        %v370 = vadd.f32 %v364, %v369
        %v371 = vrot.slane %v370, 2
        %v372 = vadd.f32 %v370, %v371
        %v373 = vrot.slane %v372, 1
        %v374 = vadd.f32 %v372, %v373
        %v375 = vmul.f32 %v374, 0.125
        %v376 = vmul.f32 %v364, %v364
        %v377 = vrot.slane %v376, 4
        %v378 = vadd.f32 %v376, %v377
        %v379 = vrot.slane %v378, 2
        %v380 = vadd.f32 %v378, %v379
        %v381 = vrot.slane %v380, 1
        %v382 = vadd.f32 %v380, %v381
        %v383 = vmul.f32 %v382, 0.125
        %v384 = vmul.f32 %v375, %v375
        %v385 = vsub.f32 %v383, %v384
        %v386 = vmax.f32 %v385, 0.0
        %v387 = vadd.f32 %v386, 1e-05
        %v388 = vrsqrt.pop %v387
        %v389 = vmul.f32 %v275, %v388
        %v390 = vmul.f32 %v375, %v389
        %v392 = vrot.slane %v390, 7
        %v394 = vsub.f32 %v275, %v392
        %v395 = vlaneseq
        %v396 = vshrl.u32 %v395, 7
        %v397 = vsub.s32 1, %v396
        %v398 = vrot.slane %v389, %v397
        %v399 = vmul.f32 %v364, %v398
        %v400 = vlaneseq
        %v401 = vshrl.u32 %v400, 7
        %v402 = vsub.s32 2, %v401
        %v403 = vrot.slane %v394, %v402
        %v404 = vadd.f32 %v399, %v403
        %vm405 = vcmp.gt.f32.partialorder %v404, 0.0
        %v406 = vlaneseq
        %v407 = vshrl.u32 %v406, 7
        %v408 = vsub.s32 3, %v407
        %v409 = vrot.slane %v275, %v408
        %v410 = vmul.f32 %v409, %v404
        %v411 = vsel %vm405, %v404, %v410
        // Predicated region
        $region49: #{tpu_custom_call.1} parent=31 // pred_check
          %p412 = pneg %p246
        $region50: #{tpu_custom_call.1} parent=31 // pred_check_branch
          %414 = sbr.rel (%p412) target = $region52
        $region51: #{tpu_custom_call.1} parent=31 // pred_region
          %415 = vst [vmem:[#allocation3] sm:$0xff] %v411
        $region52: #{tpu_custom_call.1} parent=31 // pred_fallthru
          _
        %p416 = scmp.eq.s32.totalorder %s24, 1
        // Predicated region
        $region53: #{tpu_custom_call.1} parent=31 // pred_check
          %p417 = pneg %p416
        $region54: #{tpu_custom_call.1} parent=31 // pred_check_branch
          %419 = sbr.rel (%p417) target = $region56
        $region55: #{tpu_custom_call.1} parent=31 // pred_region
          %v420 = vld [vmem:[#allocation2] sm:$0xff]
          %v421 = vadd.f32 %v420, %v411
          %422 = vst [vmem:[#allocation2] sm:$0xff] %v421
        $region56: #{tpu_custom_call.1} parent=31 // pred_fallthru
          _
        %p423 = scmp.eq.s32.totalorder %s23, 2
        %p424 = pnand %p423, %p416
        %p425 = pneg %p424
        // Predicated region
        $region57: #{tpu_custom_call.1} parent=31 // pred_check
          _
        $region58: #{tpu_custom_call.1} parent=31 // pred_check_branch
          %427 = sbr.rel (%p424) target = $region60
        $region59: #{tpu_custom_call.1} parent=31 // pred_region
          %v428 = vld [vmem:[#allocation4] sm:$0xff]
          %v429 = vld [vmem:[#allocation2] sm:$0xff]
          %v430 = vadd.f32 %v428, %v429
          %431 = vst [vmem:[#allocation10] sm:$0xff] %v430
        $region60: #{tpu_custom_call.1} parent=31 // pred_fallthru
          _
        // Predicated region
        $region61: #{tpu_custom_call.1} parent=31 // pred_check
          %p432 = pneg %p121
        $region62: #{tpu_custom_call.1} parent=31 // pred_check_branch
          %434 = sbr.rel (%p432) target = $region64
        $region63: #{tpu_custom_call.1} parent=31 // pred_region
          %s436 = ssub.s32 128, 128
          %437 = vsyncadd [#allocation6], %s436
          %s439 = sshll.u32 [#allocation10], 4
          %s440 = int_to_ptr.vmem [resolvable:$true] %s439
          %442 = dma.vmem_to_hbm [thread:$0]  %s440, 128, %s3, [#allocation6]
        $region64: #{tpu_custom_call.1} parent=31 // pred_fallthru
          _
        // Predicated region
        $region65: #{tpu_custom_call.1} parent=31 // pred_check
          %p443 = pneg %p121
        $region66: #{tpu_custom_call.1} parent=31 // pred_check_branch
          %445 = sbr.rel (%p443) target = $region68
        $region67: #{tpu_custom_call.1} parent=31 // pred_region
          %446 = dma.done [#allocation6], 128
        $region68: #{tpu_custom_call.1} parent=31 // pred_fallthru
          _
      $region32: #{tpu_custom_call.1} parent=5 // pred_fallthru
        _
      %p447 = scmp.le.s32.totalorder 2, %s14
      // Predicated region
      $region69: #{tpu_custom_call.1} parent=5 // pred_check
        %p448 = pneg %p447
      $region70: #{tpu_custom_call.1} parent=5 // pred_check_branch
        %450 = sbr.rel (%p448) target = $region72
      $region71: #{tpu_custom_call.1} parent=5 // pred_region
        %s451 = ssub.s32 %s14, 2
      $region72: #{tpu_custom_call.1} parent=5 // pred_fallthru
        _
    $region6: #{tpu_custom_call.1} parent=1 // loop_footer
      %s18 = sadd.s32 1, %s14
    $region7: #{tpu_custom_call.1} parent=1 // loop_footer_branch
      %13 = sbr.rel target = $region3
    $region8: #{tpu_custom_call.1} parent=1 // loop_exit
      _
    %452 = vsyncpa [#allocation5], 1
    %s453 = scalar_lea.sflag [#allocation5], 1
    %454 = vsyncpa %s453, 1
    %455 = vsyncpa [#allocation8], 1
    %s456 = scalar_lea.sflag [#allocation8], 1
    %457 = vsyncpa %s456, 1
    %458 = vsyncpa [#allocation6], 1
    %s459 = scalar_lea.sflag [#allocation6], 1
    %460 = vsyncpa %s459, 1

</llo_original>
